<compile_context>
chip_gen: v6e
topology: v6e:2x2x1
jax: 0.10.0
libtpu: 0.0.40
codegen_flags: <defaults>
</compile_context>

<pallas_src>
import jax
import jax.numpy as jnp
from jax import lax
from jax.experimental import pallas as pl
from jax.experimental.pallas import tpu as pltpu

BN_EPS = 1e-5
NEG_SLOPE = 0.2
VMEM_LIMIT_BYTES = 32 * 1024 * 1024  # safe on v5e / v6e / v7x


def _round_up(x, m):
    return ((x + m - 1) // m) * m


def cbl_stats_kernel(p_ref, w_ref, sum_ref, sumsq_ref):
    """Pass 1: conv-as-matmul + per-channel sum / sum-of-squares accumulation."""
    @pl.when(pl.program_id(0) == 0)
    def _():
        sum_ref[...] = jnp.zeros_like(sum_ref)
        sumsq_ref[...] = jnp.zeros_like(sumsq_ref)

    # MXU matmul: bf16 operands, f32 accumulation.
    y = jnp.dot(p_ref[...], w_ref[...], preferred_element_type=jnp.float32)
    # Per-channel (column) partial sums for this tile.  (Cross-sublane reduction; the
    # kernel is HBM-bound so the XLU slot is free filler.  If this ever becomes the
    # critical slot, route it through the MXU as ones(1, tile_m) @ y instead.)
    sum_ref[...] += jnp.sum(y, axis=0, keepdims=True)
    sumsq_ref[...] += jnp.sum(y * y, axis=0, keepdims=True)


def cbl_norm_kernel(p_ref, w_ref, scale_ref, shift_ref, o_ref):
    """Pass 2: recompute conv tile, apply fused BN affine + LeakyReLU, lane-dense store."""
    y = jnp.dot(p_ref[...], w_ref[...], preferred_element_type=jnp.float32)
    z = y * scale_ref[...] + shift_ref[...]
    o_ref[...] = jnp.where(z >= 0, z, NEG_SLOPE * z)


def _im2col_nhwc(x_nhwc, kh, kw, stride, pad):
    """Extract conv patches. Returns (N*Ho*Wo, kh*kw*Cin), K-order = (kh, kw, cin)."""
    # TODO(synk): for production sizes, move im2col inside the kernel (DMA the NHWC
    # input rows + halo into VMEM and assemble the kh*kw shifted views there) to avoid
    # the ~kh*kw x HBM read blowup of materializing patches in HBM.
    n, h, w, c = x_nhwc.shape
    ho = (h + 2 * pad - kh) // stride + 1
    wo = (w + 2 * pad - kw) // stride + 1
    xp = jnp.pad(x_nhwc, ((0, 0), (pad, pad), (pad, pad), (0, 0)))
    cols = []
    for i in range(kh):
        for j in range(kw):
            cols.append(
                xp[:, i:i + stride * (ho - 1) + 1:stride,
                      j:j + stride * (wo - 1) + 1:stride, :])  # (N, Ho, Wo, Cin)
    patches = jnp.stack(cols, axis=3)                     # (N, Ho, Wo, kh*kw, Cin)
    patches = patches.reshape(n * ho * wo, kh * kw * c)   # (M, K)
    return patches, ho, wo


def _cbl_forward(x_nchw, w_hwio, bias, gamma, beta, *, stride=2, pad=2, tile_m=512):
    """CBL forward. x_nchw: (N, Cin, H, W). Returns (N, Cout, Ho, Wo)."""
    del bias  # per-channel conv bias cancels exactly under training-mode BatchNorm.

    kh, kw, cin, cout = w_hwio.shape
    n = x_nchw.shape[0]

    x_nhwc = jnp.transpose(x_nchw, (0, 2, 3, 1)).astype(jnp.float32)
    patches, ho, wo = _im2col_nhwc(x_nhwc, kh, kw, stride, pad)
    m, k = patches.shape

    # Lane-align K and Cout to 128; tile (and zero-pad) M.
    k_pad = _round_up(k, 128)
    cout_pad = _round_up(cout, 128)
    tile_m = min(_round_up(tile_m, 8), _round_up(m, 8))
    m_pad = _round_up(m, tile_m)
    grid_m = m_pad // tile_m

    # bf16 storage for matmul operands (HBM-bound kernel); f32 accumulation in-kernel.
    # Padded M rows are all-zero -> contribute 0 to sum/sumsq; divide by the true M below.
    patches_p = jnp.pad(patches, ((0, m_pad - m), (0, k_pad - k))).astype(jnp.bfloat16)
    w_mat = w_hwio.reshape(k, cout).astype(jnp.float32)
    w_p = jnp.pad(w_mat, ((0, k_pad - k), (0, cout_pad - cout))).astype(jnp.bfloat16)

    patch_bytes = m_pad * k_pad * 2
    w_bytes = k_pad * cout_pad * 2
    mm_flops = 2 * m_pad * k_pad * cout_pad

    # ---- Pass 1: per-channel sum / sum-of-squares over all M rows (accumulator) ----
    sums, sumsqs = pl.pallas_call(
        cbl_stats_kernel,
        out_shape=(jax.ShapeDtypeStruct((1, cout_pad), jnp.float32),
                   jax.ShapeDtypeStruct((1, cout_pad), jnp.float32)),
        grid_spec=pltpu.PrefetchScalarGridSpec(
            num_scalar_prefetch=0,
            grid=(grid_m,),
            in_specs=[pl.BlockSpec((tile_m, k_pad), lambda i: (i, 0)),
                      pl.BlockSpec((k_pad, cout_pad), lambda i: (0, 0))],
            out_specs=[pl.BlockSpec((1, cout_pad), lambda i: (0, 0)),
                       pl.BlockSpec((1, cout_pad), lambda i: (0, 0))]),
        compiler_params=pltpu.CompilerParams(
            dimension_semantics=("arbitrary",),          # reduction axis (resident outputs)
            vmem_limit_bytes=VMEM_LIMIT_BYTES),
        cost_estimate=pl.CostEstimate(
            flops=mm_flops + 4 * m_pad * cout_pad,
            transcendentals=0,
            bytes_accessed=patch_bytes + w_bytes + 2 * cout_pad * 4),
    )(patches_p, w_p)

    # ---- Tiny (1, 128) finalize: BN stats -> fused scale/shift ----
    # TODO(synk): for very large M, switch the single-pass E[x^2]-E[x]^2 accumulation
    # to a compensated / two-pass scheme to avoid f32 cancellation.
    inv_m = 1.0 / m
    mean = sums * inv_m
    var = jnp.maximum(sumsqs * inv_m - mean * mean, 0.0)
    rstd = lax.rsqrt(var + BN_EPS)
    g = jnp.pad(gamma.astype(jnp.float32).reshape(1, cout),
                ((0, 0), (0, cout_pad - cout)))
    b2 = jnp.pad(beta.astype(jnp.float32).reshape(1, cout),
                 ((0, 0), (0, cout_pad - cout)))
    scale = g * rstd
    shift = b2 - mean * scale

    # ---- Pass 2: normalize + affine + LeakyReLU (independent tiles -> "parallel") ----
    out_p = pl.pallas_call(
        cbl_norm_kernel,
        out_shape=jax.ShapeDtypeStruct((m_pad, cout_pad), jnp.float32),
        grid_spec=pltpu.PrefetchScalarGridSpec(
            num_scalar_prefetch=0,
            grid=(grid_m,),
            in_specs=[pl.BlockSpec((tile_m, k_pad), lambda i: (i, 0)),
                      pl.BlockSpec((k_pad, cout_pad), lambda i: (0, 0)),
                      pl.BlockSpec((1, cout_pad), lambda i: (0, 0)),
                      pl.BlockSpec((1, cout_pad), lambda i: (0, 0))],
            out_specs=pl.BlockSpec((tile_m, cout_pad), lambda i: (i, 0))),
        compiler_params=pltpu.CompilerParams(
            dimension_semantics=("parallel",),
            vmem_limit_bytes=VMEM_LIMIT_BYTES),
        cost_estimate=pl.CostEstimate(
            flops=mm_flops + 3 * m_pad * cout_pad,
            transcendentals=0,
            bytes_accessed=patch_bytes + w_bytes + 2 * cout_pad * 4
                           + m_pad * cout_pad * 4),
    )(patches_p, w_p, scale, shift)

    out_nhwc = out_p[:m, :cout].reshape(n, ho, wo, cout)
    return jnp.transpose(out_nhwc, (0, 3, 1, 2))  # back to NCHW


# Keep the NCHW<->NHWC transposes, im2col, padding and both pallas_calls in one jit so
# XLA can schedule the glue against the kernels.
cbl_forward = jax.jit(_cbl_forward, static_argnames=("stride", "pad", "tile_m"))


def cbl_reference(x_nchw, w_hwio, bias, gamma, beta, *, stride=2, pad=2, cast_bf16=False):
    """Pure-JAX reference (conv+bias -> training-mode BN -> LeakyReLU).

    With cast_bf16=True the conv inputs are rounded to bf16 first so the reference
    matches the kernel's mixed-precision (bf16 storage, f32 accumulation) numerics.
    """
    x_nhwc = jnp.transpose(x_nchw, (0, 2, 3, 1)).astype(jnp.float32)
    w = w_hwio.astype(jnp.float32)
    if cast_bf16:
        x_nhwc = x_nhwc.astype(jnp.bfloat16).astype(jnp.float32)
        w = w.astype(jnp.bfloat16).astype(jnp.float32)
    y = lax.conv_general_dilated(
        x_nhwc, w,
        window_strides=(stride, stride),
        padding=[(pad, pad), (pad, pad)],
        dimension_numbers=("NHWC", "HWIO", "NHWC"),
    ) + bias.reshape(1, 1, 1, -1)
    mean = jnp.mean(y, axis=(0, 1, 2), keepdims=True)
    var = jnp.mean((y - mean) ** 2, axis=(0, 1, 2), keepdims=True)
    z = (y - mean) * lax.rsqrt(var + BN_EPS) * gamma.reshape(1, 1, 1, -1) \
        + beta.reshape(1, 1, 1, -1)
    z = jnp.where(z >= 0, z, NEG_SLOPE * z)
    return jnp.transpose(z, (0, 3, 1, 2))


if __name__ == "__main__":
    # Small shapes consistent with CBL(in_channels=4, out_channels=8, kernel_size=5)
    N, CIN, H, W = 2, 4, 16, 16
    COUT, KSZ = 8, 5

    key = jax.random.PRNGKey(0)
    kx, kw_, kb, kg, kbe = jax.random.split(key, 5)
    x = jax.random.normal(kx, (N, CIN, H, W), jnp.float32)                 # NCHW input
    w = 0.1 * jax.random.normal(kw_, (KSZ, KSZ, CIN, COUT), jnp.float32)   # HWIO weights
    b = 0.1 * jax.random.normal(kb, (COUT,), jnp.float32)
    gamma = 1.0 + 0.05 * jax.random.normal(kg, (COUT,), jnp.float32)       # BN affine
    beta = 0.05 * jax.random.normal(kbe, (COUT,), jnp.float32)

    # tile_m=64 -> M=128 gives a 2-step grid, exercising the tiled accumulation path.
    out = cbl_forward(x, w, b, gamma, beta, tile_m=64)
    out = jax.block_until_ready(out)

    ho = (H + 2 * 2 - KSZ) // 2 + 1
    assert out.shape == (N, COUT, ho, ho), out.shape

    # Tight check vs a reference using the same bf16-rounded matmul inputs.
    ref_mp = cbl_reference(x, w, b, gamma, beta, cast_bf16=True)
    assert jnp.allclose(out, ref_mp, atol=2e-4, rtol=1e-3), \
        "mismatch vs mixed-precision reference"

    # Loose sanity check vs the full-f32 reference (bf16 storage error only).
    ref_f32 = cbl_reference(x, w, b, gamma, beta, cast_bf16=False)
    assert jnp.allclose(out, ref_f32, atol=5e-2, rtol=5e-2), \
        "mismatch vs f32 reference"

    print("KERNEL_OK")
</pallas_src>

<mosaic_0001>
module attributes {stable_mosaic.version = 11 : i64} {
  func.func @cbl_stats_kernel(%arg0: i32, %arg1: memref<64x128xbf16, #tpu.memory_space<vmem>>, %arg2: memref<128x128xbf16, #tpu.memory_space<vmem>>, %arg3: memref<1x128xf32, #tpu.memory_space<vmem>>, %arg4: memref<1x128xf32, #tpu.memory_space<vmem>>) attributes {dimension_semantics = [#tpu.dimension_semantics<arbitrary>], iteration_bounds = array<i64: 2>, scalar_prefetch = 0 : i64, scratch_operands = 0 : i64, tpu.core_type = #tpu.core_type<tc>, window_params = [{transform_indices = @transform_0, window_bounds = array<i64: 64, 128>}, {pipeline_mode = #tpu.pipeline_mode<synchronous>, transform_indices = @transform_1, window_bounds = array<i64: 128, 128>}, {pipeline_mode = #tpu.pipeline_mode<synchronous>, transform_indices = @transform_2, window_bounds = array<i64: 1, 128>}, {pipeline_mode = #tpu.pipeline_mode<synchronous>, transform_indices = @transform_3, window_bounds = array<i64: 1, 128>}]} {
    %c0_i32 = arith.constant 0 : i32
    %0 = arith.cmpi eq, %arg0, %c0_i32 : i32
    %1 = arith.extui %0 : i1 to i32
    %c0_i32_0 = arith.constant 0 : i32
    %2 = arith.cmpi ne, %1, %c0_i32_0 : i32
    scf.if %2 {
      %cst_14 = arith.constant 0.000000e+00 : f32
      %17 = vector.broadcast %cst_14 : f32 to vector<1x128xf32>
      %c0_15 = arith.constant 0 : index
      %c0_16 = arith.constant 0 : index
      %18 = vector.load %arg3[%c0_15, %c0_16] : memref<1x128xf32, #tpu.memory_space<vmem>>, vector<1x128xf32>
      tpu.vector_store %arg3[%c0_15, %c0_16], %17 {strides = array<i32>} : memref<1x128xf32, #tpu.memory_space<vmem>>, vector<1x128xf32>,
      %cst_17 = arith.constant 0.000000e+00 : f32
      %19 = vector.broadcast %cst_17 : f32 to vector<1x128xf32>
      %c0_18 = arith.constant 0 : index
      %c0_19 = arith.constant 0 : index
      %20 = vector.load %arg4[%c0_18, %c0_19] : memref<1x128xf32, #tpu.memory_space<vmem>>, vector<1x128xf32>
      tpu.vector_store %arg4[%c0_18, %c0_19], %19 {strides = array<i32>} : memref<1x128xf32, #tpu.memory_space<vmem>>, vector<1x128xf32>,
    } else {
    }
    %c0 = arith.constant 0 : index
    %c0_1 = arith.constant 0 : index
    %3 = vector.load %arg1[%c0, %c0_1] : memref<64x128xbf16, #tpu.memory_space<vmem>>, vector<64x128xbf16>
    %c0_2 = arith.constant 0 : index
    %c0_3 = arith.constant 0 : index
    %4 = vector.load %arg2[%c0_2, %c0_3] : memref<128x128xbf16, #tpu.memory_space<vmem>>, vector<128x128xbf16>
    %cst = arith.constant dense<0.000000e+00> : vector<64x128xf32>
    %5 = tpu.matmul %3, %4, %cst {dimension_numbers = #tpu.dot_dimension_numbers<[1], [0], [0], [1], [0, 0, 1, 1], [], []>} : vector<64x128xbf16>, vector<128x128xbf16>, vector<64x128xf32> -> vector<64x128xf32>
    %c0_4 = arith.constant 0 : index
    %c0_5 = arith.constant 0 : index
    %6 = vector.load %arg3[%c0_4, %c0_5] : memref<1x128xf32, #tpu.memory_space<vmem>>, vector<1x128xf32>
    %cst_6 = arith.constant dense<0.000000e+00> : vector<128xf32>
    %7 = vector.multi_reduction <add>, %5, %cst_6 [0] : vector<64x128xf32> to vector<128xf32>
    %8 = vector.shape_cast %7 : vector<128xf32> to vector<1x128xf32>
    %9 = arith.addf %6, %8 : vector<1x128xf32>
    %c0_7 = arith.constant 0 : index
    %c0_8 = arith.constant 0 : index
    %10 = vector.load %arg3[%c0_7, %c0_8] : memref<1x128xf32, #tpu.memory_space<vmem>>, vector<1x128xf32>
    tpu.vector_store %arg3[%c0_7, %c0_8], %9 {strides = array<i32>} : memref<1x128xf32, #tpu.memory_space<vmem>>, vector<1x128xf32>,
    %c0_9 = arith.constant 0 : index
    %c0_10 = arith.constant 0 : index
    %11 = vector.load %arg4[%c0_9, %c0_10] : memref<1x128xf32, #tpu.memory_space<vmem>>, vector<1x128xf32>
    %12 = arith.mulf %5, %5 : vector<64x128xf32>
    %cst_11 = arith.constant dense<0.000000e+00> : vector<128xf32>
    %13 = vector.multi_reduction <add>, %12, %cst_11 [0] : vector<64x128xf32> to vector<128xf32>
    %14 = vector.shape_cast %13 : vector<128xf32> to vector<1x128xf32>
    %15 = arith.addf %11, %14 : vector<1x128xf32>
    %c0_12 = arith.constant 0 : index
    %c0_13 = arith.constant 0 : index
    %16 = vector.load %arg4[%c0_12, %c0_13] : memref<1x128xf32, #tpu.memory_space<vmem>>, vector<1x128xf32>
    tpu.vector_store %arg4[%c0_12, %c0_13], %15 {strides = array<i32>} : memref<1x128xf32, #tpu.memory_space<vmem>>, vector<1x128xf32>,
    return
  }
  func.func @transform_0(%arg0: i32) -> (i32, i32) {
    %c0_i32 = arith.constant 0 : i32
    %c0_i32_0 = arith.constant 0 : i32
    return %arg0, %c0_i32 : i32, i32
  }
  func.func @transform_1(%arg0: i32) -> (i32, i32) {
    %c0_i32 = arith.constant 0 : i32
    %c0_i32_0 = arith.constant 0 : i32
    %c0_i32_1 = arith.constant 0 : i32
    return %c0_i32, %c0_i32_0 : i32, i32
  }
  func.func @transform_2(%arg0: i32) -> (i32, i32) {
    %c0_i32 = arith.constant 0 : i32
    %c0_i32_0 = arith.constant 0 : i32
    %c0_i32_1 = arith.constant 0 : i32
    return %c0_i32, %c0_i32_0 : i32, i32
  }
  func.func @transform_3(%arg0: i32) -> (i32, i32) {
    %c0_i32 = arith.constant 0 : i32
    %c0_i32_0 = arith.constant 0 : i32
    %c0_i32_1 = arith.constant 0 : i32
    return %c0_i32, %c0_i32_0 : i32, i32
  }
}

module attributes {stable_mosaic.version = 11 : i64} {
  func.func @cbl_norm_kernel(%arg0: i32, %arg1: memref<64x128xbf16, #tpu.memory_space<vmem>>, %arg2: memref<128x128xbf16, #tpu.memory_space<vmem>>, %arg3: memref<1x128xf32, #tpu.memory_space<vmem>>, %arg4: memref<1x128xf32, #tpu.memory_space<vmem>>, %arg5: memref<64x128xf32, #tpu.memory_space<vmem>>) attributes {dimension_semantics = [#tpu.dimension_semantics<parallel>], iteration_bounds = array<i64: 2>, scalar_prefetch = 0 : i64, scratch_operands = 0 : i64, tpu.core_type = #tpu.core_type<tc>, window_params = [{transform_indices = @transform_0, window_bounds = array<i64: 64, 128>}, {pipeline_mode = #tpu.pipeline_mode<synchronous>, transform_indices = @transform_1, window_bounds = array<i64: 128, 128>}, {pipeline_mode = #tpu.pipeline_mode<synchronous>, transform_indices = @transform_2, window_bounds = array<i64: 1, 128>}, {pipeline_mode = #tpu.pipeline_mode<synchronous>, transform_indices = @transform_3, window_bounds = array<i64: 1, 128>}, {transform_indices = @transform_4, window_bounds = array<i64: 64, 128>}]} {
    %c0 = arith.constant 0 : index
    %c0_0 = arith.constant 0 : index
    %0 = vector.load %arg1[%c0, %c0_0] : memref<64x128xbf16, #tpu.memory_space<vmem>>, vector<64x128xbf16>
    %c0_1 = arith.constant 0 : index
    %c0_2 = arith.constant 0 : index
    %1 = vector.load %arg2[%c0_1, %c0_2] : memref<128x128xbf16, #tpu.memory_space<vmem>>, vector<128x128xbf16>
    %cst = arith.constant dense<0.000000e+00> : vector<64x128xf32>
    %2 = tpu.matmul %0, %1, %cst {dimension_numbers = #tpu.dot_dimension_numbers<[1], [0], [0], [1], [0, 0, 1, 1], [], []>} : vector<64x128xbf16>, vector<128x128xbf16>, vector<64x128xf32> -> vector<64x128xf32>
    %c0_3 = arith.constant 0 : index
    %c0_4 = arith.constant 0 : index
    %3 = vector.load %arg3[%c0_3, %c0_4] : memref<1x128xf32, #tpu.memory_space<vmem>>, vector<1x128xf32>
    %4 = vector.broadcast %3 : vector<1x128xf32> to vector<64x128xf32>
    %5 = arith.mulf %2, %4 : vector<64x128xf32>
    %c0_5 = arith.constant 0 : index
    %c0_6 = arith.constant 0 : index
    %6 = vector.load %arg4[%c0_5, %c0_6] : memref<1x128xf32, #tpu.memory_space<vmem>>, vector<1x128xf32>
    %7 = vector.broadcast %6 : vector<1x128xf32> to vector<64x128xf32>
    %8 = arith.addf %5, %7 : vector<64x128xf32>
    %cst_7 = arith.constant 0.000000e+00 : f32
    %9 = vector.broadcast %cst_7 : f32 to vector<64x128xf32>
    %10 = arith.cmpf oge, %8, %9 : vector<64x128xf32>
    %cst_8 = arith.constant 2.000000e-01 : f32
    %11 = vector.broadcast %cst_8 : f32 to vector<64x128xf32>
    %12 = arith.mulf %11, %8 : vector<64x128xf32>
    %13 = arith.select %10, %8, %12 : vector<64x128xi1>, vector<64x128xf32>
    %c0_9 = arith.constant 0 : index
    %c0_10 = arith.constant 0 : index
    %14 = vector.load %arg5[%c0_9, %c0_10] : memref<64x128xf32, #tpu.memory_space<vmem>>, vector<64x128xf32>
    tpu.vector_store %arg5[%c0_9, %c0_10], %13 {strides = array<i32>} : memref<64x128xf32, #tpu.memory_space<vmem>>, vector<64x128xf32>,
    return
  }
  func.func @transform_0(%arg0: i32) -> (i32, i32) {
    %c0_i32 = arith.constant 0 : i32
    %c0_i32_0 = arith.constant 0 : i32
    return %arg0, %c0_i32 : i32, i32
  }
  func.func @transform_1(%arg0: i32) -> (i32, i32) {
    %c0_i32 = arith.constant 0 : i32
    %c0_i32_0 = arith.constant 0 : i32
    %c0_i32_1 = arith.constant 0 : i32
    return %c0_i32, %c0_i32_0 : i32, i32
  }
  func.func @transform_2(%arg0: i32) -> (i32, i32) {
    %c0_i32 = arith.constant 0 : i32
    %c0_i32_0 = arith.constant 0 : i32
    %c0_i32_1 = arith.constant 0 : i32
    return %c0_i32, %c0_i32_0 : i32, i32
  }
  func.func @transform_3(%arg0: i32) -> (i32, i32) {
    %c0_i32 = arith.constant 0 : i32
    %c0_i32_0 = arith.constant 0 : i32
    %c0_i32_1 = arith.constant 0 : i32
    return %c0_i32, %c0_i32_0 : i32, i32
  }
  func.func @transform_4(%arg0: i32) -> (i32, i32) {
    %c0_i32 = arith.constant 0 : i32
    %c0_i32_0 = arith.constant 0 : i32
    return %arg0, %c0_i32 : i32, i32
  }
}

</mosaic_0001>

<llo_original>
// kernel: _cbl_forward.3
$region0: #{_cbl_forward.3}
  #allocation0 [shape = 'u32[]', space=smem, size = 0x4, offset = 0x4, fixed_abs, tag = 'smem constant byte address 0x4 - core index']
  #allocation1 [shape = 'u32[144,128]{1,0:T(1,128)}', space=vmem, size = 0x12000, scoped, tag = 'internal scratch']
  %s0 = inlined_call_operand.vmem [shape: bf16[128,128], index: 0, kind: input, shape index: {}]
  %s1 = inlined_call_operand.vmem [shape: bf16[128,128], index: 1, kind: input, shape index: {}]
  %s2 = inlined_call_operand.vmem [shape: f32[1,128], index: 2, kind: input, shape index: {}]
  %s3 = inlined_call_operand.vmem [shape: f32[1,128], index: 3, kind: input, shape index: {}]
  %s4 = inlined_call_operand.vmem [shape: f32[128,128], index: 4, kind: output, shape index: {}]
  %s5 = sld [smem:[#allocation0]]
  $region49: #{_cbl_forward.3} parent=0
    _
  %s7 = ssub.s32 1, %s5
  %s8 = scalar_select 0, %s7, %s5
  loop: start=0, step=1, limit=4
  $region2: #{_cbl_forward.3} parent=0 // loop_pre_header
    _
  $region3: #{_cbl_forward.3} parent=0 // loop_header
    %s10 = sphi 0, %s14
    %p11 = scmp.ge.s32.totalorder %s10, 4
    %s20 = sphi 0, %s22
    %s23 = sphi 0, %s20
    %s24 = sphi 0, %s23
    %s40 = sphi 0, %s24
    %s44 = sphi 0, %s44
    %s46 = sphi 0, %s44
    %s47 = sphi 0, %s46
    %s61 = sphi 0, %s47
    %s65 = sphi 0, %s65
    %s67 = sphi 0, %s65
    %s68 = sphi 0, %s67
    %s82 = sphi 0, %s68
    %s86 = sphi 0, %s86
    %s88 = sphi 0, %s86
    %s89 = sphi 0, %s88
    %s103 = sphi 0, %s89
    %s109 = sphi 0, %s111
    %s112 = sphi 0, %s109
    %s113 = sphi 0, %s112
    %s129 = sphi 0, %s113
  $region4: #{_cbl_forward.3} parent=0 // loop_header_branch
    %13 = sbr.rel (%p11) target = $region8
  $region5: #{_cbl_forward.3} parent=0 // loop_body
    %s15 = ssub.s32 %s10, 1
    %s16 = ssub.s32 %s10, 2
    %s17 = sadd.s32 %s10, 1
    %s18 = ssub.s32 %s10, %s17
    %p19 = scmp.eq.s32.totalorder %s18, 0
    %s21 = sadd.s32 %s20, 1
    %s22 = scalar_select %p19, %s20, %s21
    %p25 = pneg %p19
    %p26 = scmp.eq.s32.totalorder %s10, 1
    %p27 = por %p25, %p26
    %p28 = scmp.ne.s32.totalorder %s20, %s23
    %p29 = scmp.eq.s32.totalorder %s10, 0
    %p30 = por %p28, %p29
    %p31 = scmp.ne.s32.totalorder %s20, %s23
    %p32 = scmp.eq.s32.totalorder %s15, 1
    %p33 = por %p31, %p32
    %p34 = scmp.ne.s32.totalorder %s23, %s24
    %p35 = scmp.eq.s32.totalorder %s15, 0
    %p36 = por %p34, %p35
    %p37 = scmp.ne.s32.totalorder %s23, %s24
    %p38 = scmp.eq.s32.totalorder %s16, 1
    %p39 = por %p37, %p38
    %p41 = scmp.ne.s32.totalorder %s24, %s40
    %p42 = scmp.eq.s32.totalorder %s16, 0
    %p43 = por %p41, %p42
    %s45 = sadd.s32 %s44, 1
    %p48 = scmp.eq.s32.totalorder %s10, 1
    %p49 = scmp.ne.s32.totalorder %s44, %s46
    %p50 = scmp.eq.s32.totalorder %s10, 0
    %p51 = por %p49, %p50
    %p52 = scmp.ne.s32.totalorder %s44, %s46
    %p53 = scmp.eq.s32.totalorder %s15, 1
    %p54 = por %p52, %p53
    %p55 = scmp.ne.s32.totalorder %s46, %s47
    %p56 = scmp.eq.s32.totalorder %s15, 0
    %p57 = por %p55, %p56
    %p58 = scmp.ne.s32.totalorder %s46, %s47
    %p59 = scmp.eq.s32.totalorder %s16, 1
    %p60 = por %p58, %p59
    %p62 = scmp.ne.s32.totalorder %s47, %s61
    %p63 = scmp.eq.s32.totalorder %s16, 0
    %p64 = por %p62, %p63
    %s66 = sadd.s32 %s65, 1
    %p69 = scmp.eq.s32.totalorder %s10, 1
    %p70 = scmp.ne.s32.totalorder %s65, %s67
    %p71 = scmp.eq.s32.totalorder %s10, 0
    %p72 = por %p70, %p71
    %p73 = scmp.ne.s32.totalorder %s65, %s67
    %p74 = scmp.eq.s32.totalorder %s15, 1
    %p75 = por %p73, %p74
    %p76 = scmp.ne.s32.totalorder %s67, %s68
    %p77 = scmp.eq.s32.totalorder %s15, 0
    %p78 = por %p76, %p77
    %p79 = scmp.ne.s32.totalorder %s67, %s68
    %p80 = scmp.eq.s32.totalorder %s16, 1
    %p81 = por %p79, %p80
    %p83 = scmp.ne.s32.totalorder %s68, %s82
    %p84 = scmp.eq.s32.totalorder %s16, 0
    %p85 = por %p83, %p84
    %s87 = sadd.s32 %s86, 1
    %p90 = scmp.eq.s32.totalorder %s10, 1
    %p91 = scmp.ne.s32.totalorder %s86, %s88
    %p92 = scmp.eq.s32.totalorder %s10, 0
    %p93 = por %p91, %p92
    %p94 = scmp.ne.s32.totalorder %s86, %s88
    %p95 = scmp.eq.s32.totalorder %s15, 1
    %p96 = por %p94, %p95
    %p97 = scmp.ne.s32.totalorder %s88, %s89
    %p98 = scmp.eq.s32.totalorder %s15, 0
    %p99 = por %p97, %p98
    %p100 = scmp.ne.s32.totalorder %s88, %s89
    %p101 = scmp.eq.s32.totalorder %s16, 1
    %p102 = por %p100, %p101
    %p104 = scmp.ne.s32.totalorder %s89, %s103
    %p105 = scmp.eq.s32.totalorder %s16, 0
    %p106 = por %p104, %p105
    %s107 = ssub.s32 %s10, %s17
    %p108 = scmp.eq.s32.totalorder %s107, 0
    %s110 = sadd.s32 %s109, 1
    %s111 = scalar_select %p108, %s109, %s110
    %p114 = pneg %p108
    %p115 = scmp.eq.s32.totalorder %s10, 1
    %p116 = por %p114, %p115
    %p117 = scmp.ne.s32.totalorder %s109, %s112
    %p118 = scmp.eq.s32.totalorder %s10, 0
    %p119 = por %p117, %p118
    %p120 = scmp.ne.s32.totalorder %s109, %s112
    %p121 = scmp.eq.s32.totalorder %s15, 1
    %p122 = por %p120, %p121
    %p123 = scmp.ne.s32.totalorder %s112, %s113
    %p124 = scmp.eq.s32.totalorder %s15, 0
    %p125 = por %p123, %p124
    %p126 = scmp.ne.s32.totalorder %s112, %s113
    %p127 = scmp.eq.s32.totalorder %s16, 1
    %p128 = por %p126, %p127
    %p130 = scmp.ne.s32.totalorder %s113, %s129
    %p131 = scmp.eq.s32.totalorder %s16, 0
    %p132 = por %p130, %p131
    %p133 = scmp.le.s32.totalorder 1, %s10
    %p134 = scmp.lt.s32.totalorder %s10, 3
    %p135 = pnand %p133, %p134
    %p136 = pneg %p135
    // Predicated region
    $region9: #{_cbl_forward.3} parent=5 // pred_check
      _
    $region10: #{_cbl_forward.3} parent=5 // pred_check_branch
      %138 = sbr.rel (%p135) target = $region12
    $region11: #{_cbl_forward.3} parent=5 // pred_region
      %s139 = ssub.s32 %s10, 1
      // Predicated region
      $region13: #{_cbl_forward.3} parent=11 // pred_check
        %p140 = pneg %p57
      $region14: #{_cbl_forward.3} parent=11 // pred_check_branch
        %142 = sbr.rel (%p140) target = $region16
      $region15: #{_cbl_forward.3} parent=11 // pred_region
        _
      $region16: #{_cbl_forward.3} parent=11 // pred_fallthru
        _
      // Predicated region
      $region17: #{_cbl_forward.3} parent=11 // pred_check
        %p143 = pneg %p78
      $region18: #{_cbl_forward.3} parent=11 // pred_check_branch
        %145 = sbr.rel (%p143) target = $region20
      $region19: #{_cbl_forward.3} parent=11 // pred_region
        _
      $region20: #{_cbl_forward.3} parent=11 // pred_fallthru
        _
      // Predicated region
      $region21: #{_cbl_forward.3} parent=11 // pred_check
        %p146 = pneg %p99
      $region22: #{_cbl_forward.3} parent=11 // pred_check_branch
        %148 = sbr.rel (%p146) target = $region24
      $region23: #{_cbl_forward.3} parent=11 // pred_region
        _
      $region24: #{_cbl_forward.3} parent=11 // pred_fallthru
        _
    $region12: #{_cbl_forward.3} parent=5 // pred_fallthru
      _
    %p149 = scmp.lt.s32.totalorder %s10, 2
    // Predicated region
    $region25: #{_cbl_forward.3} parent=5 // pred_check
      %p150 = pneg %p149
    $region26: #{_cbl_forward.3} parent=5 // pred_check_branch
      %152 = sbr.rel (%p150) target = $region28
    $region27: #{_cbl_forward.3} parent=5 // pred_region
      // Predicated region
      $region29: #{_cbl_forward.3} parent=27 // pred_check
        %p153 = pneg %p30
      $region30: #{_cbl_forward.3} parent=27 // pred_check_branch
        %155 = sbr.rel (%p153) target = $region32
      $region31: #{_cbl_forward.3} parent=27 // pred_region
        %s156 = smul.u32 8, %s10
        %p157 = scmp.lt.s32.totalorder %s156, 15
        %s158 = scalar_select %p157, %s156, 15
        %s159 = smul.addr %s158, 4
        %s160 = scalar_lea.vmem %s0, %s159
        %s161 = smul.u32 8, %s10
      $region32: #{_cbl_forward.3} parent=27 // pred_fallthru
        _
    $region28: #{_cbl_forward.3} parent=5 // pred_fallthru
      _
    %p162 = scmp.le.s32.totalorder 1, %s10
    %p163 = scmp.lt.s32.totalorder %s10, 3
    %p164 = pnand %p162, %p163
    %p165 = pneg %p164
    // Predicated region
    $region33: #{_cbl_forward.3} parent=5 // pred_check
      _
    $region34: #{_cbl_forward.3} parent=5 // pred_check_branch
      %167 = sbr.rel (%p164) target = $region36
    $region35: #{_cbl_forward.3} parent=5 // pred_region
      %s168 = ssub.s32 %s10, 1
      %s169 = smul.u32 8, %s15
      %p170 = scmp.lt.s32.totalorder %s169, 15
      %s171 = scalar_select %p170, %s169, 15
      %s172 = smul.addr %s171, 4
      %s173 = scalar_lea.vmem %s0, %s172
      %p174 = pneg %p36
      %p175 = pneg %p33
      %p176 = pneg %p57
      %p177 = pneg %p54
      %p178 = pneg %p78
      %p179 = pneg %p75
      %p180 = pneg %p99
      %p181 = pneg %p96
      %p182 = pneg %p125
      %p183 = pneg %p122
      %s184 = smul.u32 8, %s15
      %p185 = scmp.lt.s32.totalorder %s184, 15
      %s186 = scalar_select %p185, %s184, 15
      %s187 = smul.addr %s186, 8
      %s188 = scalar_lea.vmem %s4, %s187
      %s189 = smul.u32 8, %s15
      %p190 = scmp.lt.s32.totalorder %s189, 15
      %s191 = scalar_select %p190, %s189, 15
      %s192 = smul.addr %s191, 4
      %s193 = scalar_lea.vmem %s0, %s192
      %s194 = smul.u32 8, %s15
      %s195 = smul.u32 8, %s15
      %p196 = scmp.lt.s32.totalorder %s195, 15
      %s197 = scalar_select %p196, %s195, 15
      %s198 = smul.addr %s197, 8
      %s199 = scalar_lea.vmem %s4, %s198
      %s200 = smul.u32 8, %s15
      %v202 = vld [vmem:[%s193] sm:$0xf]
      %v203 = vld [vmem:[%s193 + $0x4] sm:$0xf]
      %v204 = vld [vmem:[%s193 + $0x8] sm:$0xf]
      %v205 = vld [vmem:[%s193 + $0xc] sm:$0xf]
      %v206 = vld [vmem:[%s193 + $0x10] sm:$0xf]
      %v207 = vld [vmem:[%s193 + $0x14] sm:$0xf]
      %v208 = vld [vmem:[%s193 + $0x18] sm:$0xf]
      %v209 = vld [vmem:[%s193 + $0x1c] sm:$0xf]
      %v210 = vld [vmem:[%s1] sm:$0xf]
      %v211 = vld [vmem:[%s1 + $0x4] sm:$0xf]
      %v212 = vld [vmem:[%s1 + $0x8] sm:$0xf]
      %v213 = vld [vmem:[%s1 + $0xc] sm:$0xf]
      %v214 = vld [vmem:[%s1 + $0x10] sm:$0xf]
      %v215 = vld [vmem:[%s1 + $0x14] sm:$0xf]
      %v216 = vld [vmem:[%s1 + $0x18] sm:$0xf]
      %v217 = vld [vmem:[%s1 + $0x1c] sm:$0xf]
      %v218 = vld [vmem:[%s1 + $0x20] sm:$0xf]
      %v219 = vld [vmem:[%s1 + $0x24] sm:$0xf]
      %v220 = vld [vmem:[%s1 + $0x28] sm:$0xf]
      %v221 = vld [vmem:[%s1 + $0x2c] sm:$0xf]
      %v222 = vld [vmem:[%s1 + $0x30] sm:$0xf]
      %v223 = vld [vmem:[%s1 + $0x34] sm:$0xf]
      %v224 = vld [vmem:[%s1 + $0x38] sm:$0xf]
      %v225 = vld [vmem:[%s1 + $0x3c] sm:$0xf]
      %v234 = vunpack.c.l.b16 %v202
      %v235 = vunpack.c.l.b16 %v203
      %v236 = vunpack.c.l.b16 %v204
      %v237 = vunpack.c.l.b16 %v205
      %v238 = vunpack.c.l.b16 %v206
      %v239 = vunpack.c.l.b16 %v207
      %v240 = vunpack.c.l.b16 %v208
      %v241 = vunpack.c.l.b16 %v209
      %v242 = vpack.c.b16 %v235, %v234
      %v243 = vpack.c.b16 %v237, %v236
      %v244 = vpack.c.b16 %v239, %v238
      %v245 = vpack.c.b16 %v241, %v240
      %v266 = vunpack.c.l.b16 %v210
      %v267 = vunpack.c.l.b16 %v211
      %v268 = vunpack.c.l.b16 %v212
      %v269 = vunpack.c.l.b16 %v213
      %v270 = vunpack.c.l.b16 %v214
      %v271 = vunpack.c.l.b16 %v215
      %v272 = vunpack.c.l.b16 %v216
      %v273 = vunpack.c.l.b16 %v217
      %v274 = vunpack.c.l.b16 %v218
      %v275 = vunpack.c.l.b16 %v219
      %v276 = vunpack.c.l.b16 %v220
      %v277 = vunpack.c.l.b16 %v221
      %v278 = vunpack.c.l.b16 %v222
      %v279 = vunpack.c.l.b16 %v223
      %v280 = vunpack.c.l.b16 %v224
      %v281 = vunpack.c.l.b16 %v225
      %v282 = vpack.c.b16 %v267, %v266
      %v283 = vpack.c.b16 %v269, %v268
      %v284 = vpack.c.b16 %v271, %v270
      %v285 = vpack.c.b16 %v273, %v272
      %v286 = vpack.c.b16 %v275, %v274
      %v287 = vpack.c.b16 %v277, %v276
      %v288 = vpack.c.b16 %v279, %v278
      %v289 = vpack.c.b16 %v281, %v280
      %298 = vmatprep.subr.bf16.mxu0 0
      %299 = vmatpush1.bf16.msra.mxu0 %v289
      %300 = vmatprep.subr.bf16.mxu0 0
      %301 = vmatpush1.bf16.msra.mxu0 %v288
      %302 = vmatprep.subr.bf16.mxu0 0
      %303 = vmatpush1.bf16.msra.mxu0 %v287
      %304 = vmatprep.subr.bf16.mxu0 0
      %305 = vmatpush1.bf16.msra.mxu0 %v286
      %306 = vmatprep.subr.bf16.mxu0 0
      %307 = vmatpush1.bf16.msra.mxu0 %v285
      %308 = vmatprep.subr.bf16.mxu0 0
      %309 = vmatpush1.bf16.msra.mxu0 %v284
      %310 = vmatprep.subr.bf16.mxu0 0
      %311 = vmatpush1.bf16.msra.mxu0 %v283
      %312 = vmatprep.subr.bf16.mxu0 0
      %313 = vmatpush1.bf16.msra.mxu0 %v282
      %314 = vmatprep.subr.bf16.mxu0 0
      %315 = vmatpush2.bf16.msra.mxu0 0
      %316 = vmatprep.subr.bf16.mxu0 0
      %317 = vmatpush2.bf16.msra.mxu0 0
      %318 = vmatprep.subr.bf16.mxu0 0
      %319 = vmatpush2.bf16.msra.mxu0 0
      %320 = vmatprep.subr.bf16.mxu0 0
      %321 = vmatpush2.bf16.msra.mxu0 0
      %322 = vmatprep.subr.bf16.mxu0 0
      %323 = vmatpush2.bf16.msra.mxu0 0
      %324 = vmatprep.subr.bf16.mxu0 0
      %325 = vmatpush2.bf16.msra.mxu0 0
      %326 = vmatprep.subr.bf16.mxu0 0
      %327 = vmatpush2.bf16.msra.mxu0 0
      %328 = vmatprep.subr.bf16.mxu0 0
      %329 = vmatpush2.bf16.msra.mxu0 0
      %330 = vmatprep.mubr.bf16.mxu0 0
      %331 = vmatmul.mubr.bf16.gmra.mxu0 %v242
      %v332 = vpop.f32.mrf.mxu0
      %v333 = vadd.f32 0.0, %v332
      %v334 = vpop.f32.mrf.mxu0
      %v335 = vpop.f32.mrf.mxu0
      %v336 = vadd.f32 0.0, %v335
      %v337 = vpop.f32.mrf.mxu0
      %338 = vmatprep.mubr.bf16.mxu0 0
      %339 = vmatmul.mubr.bf16.gmra.mxu0 %v243
      %v340 = vpop.f32.mrf.mxu0
      %v341 = vadd.f32 0.0, %v340
      %v342 = vpop.f32.mrf.mxu0
      %v343 = vpop.f32.mrf.mxu0
      %v344 = vadd.f32 0.0, %v343
      %v345 = vpop.f32.mrf.mxu0
      %346 = vmatprep.mubr.bf16.mxu0 0
      %347 = vmatmul.mubr.bf16.gmra.mxu0 %v244
      %v348 = vpop.f32.mrf.mxu0
      %v349 = vadd.f32 0.0, %v348
      %v350 = vpop.f32.mrf.mxu0
      %v351 = vpop.f32.mrf.mxu0
      %v352 = vadd.f32 0.0, %v351
      %v353 = vpop.f32.mrf.mxu0
      %354 = vmatprep.mubr.bf16.mxu0 0
      %355 = vmatmul.mubr.bf16.gmra.mxu0 %v245
      %v356 = vpop.f32.mrf.mxu0
      %v357 = vadd.f32 0.0, %v356
      %v358 = vpop.f32.mrf.mxu0
      %v359 = vpop.f32.mrf.mxu0
      %v360 = vadd.f32 0.0, %v359
      %v361 = vpop.f32.mrf.mxu0
      %362 = vdwg.mxu0
      %v363 = vld [vmem:[%s2] sm:$0x1]
      %v365 = vlaneseq
      %v366 = vshrl.u32 %v365, 7
      %v367 = vsub.s32 0, %v366
      %v368 = vrot.slane %v363, %v367
      %v370 = vmul.f32 %v333, %v368
      %v371 = vmul.f32 %v336, %v368
      %v372 = vmul.f32 %v341, %v368
      %v373 = vmul.f32 %v344, %v368
      %v374 = vmul.f32 %v349, %v368
      %v375 = vmul.f32 %v352, %v368
      %v376 = vmul.f32 %v357, %v368
      %v377 = vmul.f32 %v360, %v368
      %v378 = vld [vmem:[%s3] sm:$0x1]
      %v380 = vlaneseq
      %v381 = vshrl.u32 %v380, 7
      %v382 = vsub.s32 0, %v381
      %v383 = vrot.slane %v378, %v382
      %v385 = vadd.f32 %v370, %v383
      %v386 = vadd.f32 %v371, %v383
      %v387 = vadd.f32 %v372, %v383
      %v388 = vadd.f32 %v373, %v383
      %v389 = vadd.f32 %v374, %v383
      %v390 = vadd.f32 %v375, %v383
      %v391 = vadd.f32 %v376, %v383
      %v392 = vadd.f32 %v377, %v383
      %vm393 = vcmp.ge.f32.partialorder %v385, 0.0
      %vm394 = vcmp.ge.f32.partialorder %v386, 0.0
      %vm395 = vcmp.ge.f32.partialorder %v387, 0.0
      %vm396 = vcmp.ge.f32.partialorder %v388, 0.0
      %vm397 = vcmp.ge.f32.partialorder %v389, 0.0
      %vm398 = vcmp.ge.f32.partialorder %v390, 0.0
      %vm399 = vcmp.ge.f32.partialorder %v391, 0.0
      %vm400 = vcmp.ge.f32.partialorder %v392, 0.0
      %v401 = vmul.f32 %v385, 0.2
      %v402 = vmul.f32 %v386, 0.2
      %v403 = vmul.f32 %v387, 0.2
      %v404 = vmul.f32 %v388, 0.2
      %v405 = vmul.f32 %v389, 0.2
      %v406 = vmul.f32 %v390, 0.2
      %v407 = vmul.f32 %v391, 0.2
      %v408 = vmul.f32 %v392, 0.2
      %v409 = vsel %vm393, %v385, %v401
      %v410 = vsel %vm394, %v386, %v402
      %v411 = vsel %vm395, %v387, %v403
      %v412 = vsel %vm396, %v388, %v404
      %v413 = vsel %vm397, %v389, %v405
      %v414 = vsel %vm398, %v390, %v406
      %v415 = vsel %vm399, %v391, %v407
      %v416 = vsel %vm400, %v392, %v408
      %417 = vst [vmem:[%s199] sm:$0xff] %v409
      %418 = vst [vmem:[%s199 + $0x8] sm:$0xff] %v410
      %419 = vst [vmem:[%s199 + $0x10] sm:$0xff] %v411
      %420 = vst [vmem:[%s199 + $0x18] sm:$0xff] %v412
      %421 = vst [vmem:[%s199 + $0x20] sm:$0xff] %v413
      %422 = vst [vmem:[%s199 + $0x28] sm:$0xff] %v414
      %423 = vst [vmem:[%s199 + $0x30] sm:$0xff] %v415
      %424 = vst [vmem:[%s199 + $0x38] sm:$0xff] %v416
      %s425 = smul.u32 8, %s15
      %p426 = scmp.lt.s32.totalorder %s425, 15
      %s427 = scalar_select %p426, %s425, 15
      %s428 = smul.addr %s427, 8
      %s429 = scalar_lea.vmem %s4, %s428
      // Predicated region
      $region37: #{_cbl_forward.3} parent=35 // pred_check
        %p430 = pneg %p122
      $region38: #{_cbl_forward.3} parent=35 // pred_check_branch
        %432 = sbr.rel (%p430) target = $region40
      $region39: #{_cbl_forward.3} parent=35 // pred_region
        %s433 = smul.u32 8, %s15
      $region40: #{_cbl_forward.3} parent=35 // pred_fallthru
        _
    $region36: #{_cbl_forward.3} parent=5 // pred_fallthru
      _
    %p434 = scmp.le.s32.totalorder 2, %s10
    // Predicated region
    $region41: #{_cbl_forward.3} parent=5 // pred_check
      %p435 = pneg %p434
    $region42: #{_cbl_forward.3} parent=5 // pred_check_branch
      %437 = sbr.rel (%p435) target = $region44
    $region43: #{_cbl_forward.3} parent=5 // pred_region
      %s438 = ssub.s32 %s10, 2
      // Predicated region
      $region45: #{_cbl_forward.3} parent=43 // pred_check
        %p439 = pneg %p128
      $region46: #{_cbl_forward.3} parent=43 // pred_check_branch
        %441 = sbr.rel (%p439) target = $region48
      $region47: #{_cbl_forward.3} parent=43 // pred_region
        %s442 = smul.u32 8, %s16
        %p443 = scmp.lt.s32.totalorder %s442, 15
        %s444 = scalar_select %p443, %s442, 15
        %s445 = smul.addr %s444, 8
        %s446 = scalar_lea.vmem %s4, %s445
      $region48: #{_cbl_forward.3} parent=43 // pred_fallthru
        _
    $region44: #{_cbl_forward.3} parent=5 // pred_fallthru
      _
  $region6: #{_cbl_forward.3} parent=0 // loop_footer
    %s14 = sadd.s32 1, %s10
  $region7: #{_cbl_forward.3} parent=0 // loop_footer_branch
    %9 = sbr.rel target = $region3
  $region8: #{_cbl_forward.3} parent=0 // loop_exit
    _

// kernel: _cbl_forward.2
$region0: #{_cbl_forward.2}
  #allocation0 [shape = 'u32[]', space=smem, size = 0x4, offset = 0x4, fixed_abs, tag = 'smem constant byte address 0x4 - core index']
  #allocation1 [shape = 'u32[144,128]{1,0:T(1,128)}', space=vmem, size = 0x12000, scoped, tag = 'internal scratch']
  %s0 = inlined_call_operand.vmem [shape: bf16[128,128], index: 0, kind: input, shape index: {}]
  %s1 = inlined_call_operand.vmem [shape: bf16[128,128], index: 1, kind: input, shape index: {}]
  %s2 = inlined_call_operand.vmem [shape: f32[1,128], index: 2, kind: output, shape index: {0}]
  %s3 = inlined_call_operand.vmem [shape: f32[1,128], index: 3, kind: output, shape index: {1}]
  %4 = xla_tuple %s2, %s3
  %s5 = sld [smem:[#allocation0]]
  $region53: #{_cbl_forward.2} parent=0
    _
  %s7 = ssub.s32 1, %s5
  %s8 = scalar_select 0, %s7, %s5
  loop: start=0, step=1, limit=4
  $region2: #{_cbl_forward.2} parent=0 // loop_pre_header
    _
  $region3: #{_cbl_forward.2} parent=0 // loop_header
    %s10 = sphi 0, %s14
    %p11 = scmp.ge.s32.totalorder %s10, 4
    %s20 = sphi 0, %s22
    %s23 = sphi 0, %s20
    %s24 = sphi 0, %s23
    %s40 = sphi 0, %s24
    %s44 = sphi 0, %s44
    %s46 = sphi 0, %s44
    %s47 = sphi 0, %s46
    %s61 = sphi 0, %s47
    %s65 = sphi 0, %s65
    %s67 = sphi 0, %s65
    %s68 = sphi 0, %s67
    %s82 = sphi 0, %s68
    %s86 = sphi 0, %s86
    %s88 = sphi 0, %s86
    %s89 = sphi 0, %s88
    %s103 = sphi 0, %s89
  $region4: #{_cbl_forward.2} parent=0 // loop_header_branch
    %13 = sbr.rel (%p11) target = $region8
  $region5: #{_cbl_forward.2} parent=0 // loop_body
    %s15 = ssub.s32 %s10, 1
    %s16 = ssub.s32 %s10, 2
    %s17 = sadd.s32 %s10, 1
    %s18 = ssub.s32 %s10, %s17
    %p19 = scmp.eq.s32.totalorder %s18, 0
    %s21 = sadd.s32 %s20, 1
    %s22 = scalar_select %p19, %s20, %s21
    %p25 = pneg %p19
    %p26 = scmp.eq.s32.totalorder %s10, 1
    %p27 = por %p25, %p26
    %p28 = scmp.ne.s32.totalorder %s20, %s23
    %p29 = scmp.eq.s32.totalorder %s10, 0
    %p30 = por %p28, %p29
    %p31 = scmp.ne.s32.totalorder %s20, %s23
    %p32 = scmp.eq.s32.totalorder %s15, 1
    %p33 = por %p31, %p32
    %p34 = scmp.ne.s32.totalorder %s23, %s24
    %p35 = scmp.eq.s32.totalorder %s15, 0
    %p36 = por %p34, %p35
    %p37 = scmp.ne.s32.totalorder %s23, %s24
    %p38 = scmp.eq.s32.totalorder %s16, 1
    %p39 = por %p37, %p38
    %p41 = scmp.ne.s32.totalorder %s24, %s40
    %p42 = scmp.eq.s32.totalorder %s16, 0
    %p43 = por %p41, %p42
    %s45 = sadd.s32 %s44, 1
    %p48 = scmp.eq.s32.totalorder %s10, 1
    %p49 = scmp.ne.s32.totalorder %s44, %s46
    %p50 = scmp.eq.s32.totalorder %s10, 0
    %p51 = por %p49, %p50
    %p52 = scmp.ne.s32.totalorder %s44, %s46
    %p53 = scmp.eq.s32.totalorder %s15, 1
    %p54 = por %p52, %p53
    %p55 = scmp.ne.s32.totalorder %s46, %s47
    %p56 = scmp.eq.s32.totalorder %s15, 0
    %p57 = por %p55, %p56
    %p58 = scmp.ne.s32.totalorder %s46, %s47
    %p59 = scmp.eq.s32.totalorder %s16, 1
    %p60 = por %p58, %p59
    %p62 = scmp.ne.s32.totalorder %s47, %s61
    %p63 = scmp.eq.s32.totalorder %s16, 0
    %p64 = por %p62, %p63
    %s66 = sadd.s32 %s65, 1
    %p69 = scmp.eq.s32.totalorder %s10, 1
    %p70 = scmp.ne.s32.totalorder %s65, %s67
    %p71 = scmp.eq.s32.totalorder %s10, 0
    %p72 = por %p70, %p71
    %p73 = scmp.ne.s32.totalorder %s65, %s67
    %p74 = scmp.eq.s32.totalorder %s15, 1
    %p75 = por %p73, %p74
    %p76 = scmp.ne.s32.totalorder %s67, %s68
    %p77 = scmp.eq.s32.totalorder %s15, 0
    %p78 = por %p76, %p77
    %p79 = scmp.ne.s32.totalorder %s67, %s68
    %p80 = scmp.eq.s32.totalorder %s16, 1
    %p81 = por %p79, %p80
    %p83 = scmp.ne.s32.totalorder %s68, %s82
    %p84 = scmp.eq.s32.totalorder %s16, 0
    %p85 = por %p83, %p84
    %s87 = sadd.s32 %s86, 1
    %p90 = scmp.eq.s32.totalorder %s10, 1
    %p91 = scmp.ne.s32.totalorder %s86, %s88
    %p92 = scmp.eq.s32.totalorder %s10, 0
    %p93 = por %p91, %p92
    %p94 = scmp.ne.s32.totalorder %s86, %s88
    %p95 = scmp.eq.s32.totalorder %s15, 1
    %p96 = por %p94, %p95
    %p97 = scmp.ne.s32.totalorder %s88, %s89
    %p98 = scmp.eq.s32.totalorder %s15, 0
    %p99 = por %p97, %p98
    %p100 = scmp.ne.s32.totalorder %s88, %s89
    %p101 = scmp.eq.s32.totalorder %s16, 1
    %p102 = por %p100, %p101
    %p104 = scmp.ne.s32.totalorder %s89, %s103
    %p105 = scmp.eq.s32.totalorder %s16, 0
    %p106 = por %p104, %p105
    %p107 = scmp.le.s32.totalorder 1, %s10
    %p108 = scmp.lt.s32.totalorder %s10, 3
    %p109 = pnand %p107, %p108
    %p110 = pneg %p109
    // Predicated region
    $region9: #{_cbl_forward.2} parent=5 // pred_check
      _
    $region10: #{_cbl_forward.2} parent=5 // pred_check_branch
      %112 = sbr.rel (%p109) target = $region12
    $region11: #{_cbl_forward.2} parent=5 // pred_region
      %s113 = ssub.s32 %s10, 1
      // Predicated region
      $region13: #{_cbl_forward.2} parent=11 // pred_check
        %p114 = pneg %p57
      $region14: #{_cbl_forward.2} parent=11 // pred_check_branch
        %116 = sbr.rel (%p114) target = $region16
      $region15: #{_cbl_forward.2} parent=11 // pred_region
        _
      $region16: #{_cbl_forward.2} parent=11 // pred_fallthru
        _
    $region12: #{_cbl_forward.2} parent=5 // pred_fallthru
      _
    %p117 = scmp.lt.s32.totalorder %s10, 2
    // Predicated region
    $region17: #{_cbl_forward.2} parent=5 // pred_check
      %p118 = pneg %p117
    $region18: #{_cbl_forward.2} parent=5 // pred_check_branch
      %120 = sbr.rel (%p118) target = $region20
    $region19: #{_cbl_forward.2} parent=5 // pred_region
      // Predicated region
      $region21: #{_cbl_forward.2} parent=19 // pred_check
        %p121 = pneg %p30
      $region22: #{_cbl_forward.2} parent=19 // pred_check_branch
        %123 = sbr.rel (%p121) target = $region24
      $region23: #{_cbl_forward.2} parent=19 // pred_region
        %s124 = smul.u32 8, %s10
        %p125 = scmp.lt.s32.totalorder %s124, 15
        %s126 = scalar_select %p125, %s124, 15
        %s127 = smul.addr %s126, 4
        %s128 = scalar_lea.vmem %s0, %s127
        %s129 = smul.u32 8, %s10
      $region24: #{_cbl_forward.2} parent=19 // pred_fallthru
        _
    $region20: #{_cbl_forward.2} parent=5 // pred_fallthru
      _
    %p130 = scmp.le.s32.totalorder 1, %s10
    %p131 = scmp.lt.s32.totalorder %s10, 3
    %p132 = pnand %p130, %p131
    %p133 = pneg %p132
    // Predicated region
    $region25: #{_cbl_forward.2} parent=5 // pred_check
      _
    $region26: #{_cbl_forward.2} parent=5 // pred_check_branch
      %135 = sbr.rel (%p132) target = $region28
    $region27: #{_cbl_forward.2} parent=5 // pred_region
      %s136 = ssub.s32 %s10, 1
      %s137 = smul.u32 8, %s15
      %p138 = scmp.lt.s32.totalorder %s137, 15
      %s139 = scalar_select %p138, %s137, 15
      %s140 = smul.addr %s139, 4
      %s141 = scalar_lea.vmem %s0, %s140
      %p142 = pneg %p36
      %p143 = pneg %p33
      %p144 = pneg %p57
      %p145 = pneg %p54
      %p146 = pneg %p78
      %p147 = pneg %p75
      %p148 = pneg %p99
      %p149 = pneg %p96
      %s150 = smul.u32 8, %s15
      %p151 = scmp.lt.s32.totalorder %s150, 15
      %s152 = scalar_select %p151, %s150, 15
      %s153 = smul.addr %s152, 4
      %s154 = scalar_lea.vmem %s0, %s153
      %s155 = smul.u32 8, %s15
      %p157 = scmp.eq.s32.totalorder %s15, 0
      // Predicated region
      $region29: #{_cbl_forward.2} parent=27 // pred_check
        %p158 = pneg %p157
      $region30: #{_cbl_forward.2} parent=27 // pred_check_branch
        %160 = sbr.rel (%p158) target = $region32
      $region31: #{_cbl_forward.2} parent=27 // pred_region
        %161 = vst [vmem:[%s2] sm:$0x1] 0.0
        %162 = vst [vmem:[%s3] sm:$0x1] 0.0
      $region32: #{_cbl_forward.2} parent=27 // pred_fallthru
        _
      %v163 = vld [vmem:[%s154] sm:$0xf]
      %v164 = vld [vmem:[%s154 + $0x4] sm:$0xf]
      %v165 = vld [vmem:[%s154 + $0x8] sm:$0xf]
      %v166 = vld [vmem:[%s154 + $0xc] sm:$0xf]
      %v167 = vld [vmem:[%s154 + $0x10] sm:$0xf]
      %v168 = vld [vmem:[%s154 + $0x14] sm:$0xf]
      %v169 = vld [vmem:[%s154 + $0x18] sm:$0xf]
      %v170 = vld [vmem:[%s154 + $0x1c] sm:$0xf]
      %v171 = vld [vmem:[%s1] sm:$0xf]
      %v172 = vld [vmem:[%s1 + $0x4] sm:$0xf]
      %v173 = vld [vmem:[%s1 + $0x8] sm:$0xf]
      %v174 = vld [vmem:[%s1 + $0xc] sm:$0xf]
      %v175 = vld [vmem:[%s1 + $0x10] sm:$0xf]
      %v176 = vld [vmem:[%s1 + $0x14] sm:$0xf]
      %v177 = vld [vmem:[%s1 + $0x18] sm:$0xf]
      %v178 = vld [vmem:[%s1 + $0x1c] sm:$0xf]
      %v179 = vld [vmem:[%s1 + $0x20] sm:$0xf]
      %v180 = vld [vmem:[%s1 + $0x24] sm:$0xf]
      %v181 = vld [vmem:[%s1 + $0x28] sm:$0xf]
      %v182 = vld [vmem:[%s1 + $0x2c] sm:$0xf]
      %v183 = vld [vmem:[%s1 + $0x30] sm:$0xf]
      %v184 = vld [vmem:[%s1 + $0x34] sm:$0xf]
      %v185 = vld [vmem:[%s1 + $0x38] sm:$0xf]
      %v186 = vld [vmem:[%s1 + $0x3c] sm:$0xf]
      %v195 = vunpack.c.l.b16 %v163
      %v196 = vunpack.c.l.b16 %v164
      %v197 = vunpack.c.l.b16 %v165
      %v198 = vunpack.c.l.b16 %v166
      %v199 = vunpack.c.l.b16 %v167
      %v200 = vunpack.c.l.b16 %v168
      %v201 = vunpack.c.l.b16 %v169
      %v202 = vunpack.c.l.b16 %v170
      %v203 = vpack.c.b16 %v196, %v195
      %v204 = vpack.c.b16 %v198, %v197
      %v205 = vpack.c.b16 %v200, %v199
      %v206 = vpack.c.b16 %v202, %v201
      %v227 = vunpack.c.l.b16 %v171
      %v228 = vunpack.c.l.b16 %v172
      %v229 = vunpack.c.l.b16 %v173
      %v230 = vunpack.c.l.b16 %v174
      %v231 = vunpack.c.l.b16 %v175
      %v232 = vunpack.c.l.b16 %v176
      %v233 = vunpack.c.l.b16 %v177
      %v234 = vunpack.c.l.b16 %v178
      %v235 = vunpack.c.l.b16 %v179
      %v236 = vunpack.c.l.b16 %v180
      %v237 = vunpack.c.l.b16 %v181
      %v238 = vunpack.c.l.b16 %v182
      %v239 = vunpack.c.l.b16 %v183
      %v240 = vunpack.c.l.b16 %v184
      %v241 = vunpack.c.l.b16 %v185
      %v242 = vunpack.c.l.b16 %v186
      %v243 = vpack.c.b16 %v228, %v227
      %v244 = vpack.c.b16 %v230, %v229
      %v245 = vpack.c.b16 %v232, %v231
      %v246 = vpack.c.b16 %v234, %v233
      %v247 = vpack.c.b16 %v236, %v235
      %v248 = vpack.c.b16 %v238, %v237
      %v249 = vpack.c.b16 %v240, %v239
      %v250 = vpack.c.b16 %v242, %v241
      %259 = vmatprep.subr.bf16.mxu0 0
      %260 = vmatpush1.bf16.msra.mxu0 %v250
      %261 = vmatprep.subr.bf16.mxu0 0
      %262 = vmatpush1.bf16.msra.mxu0 %v249
      %263 = vmatprep.subr.bf16.mxu0 0
      %264 = vmatpush1.bf16.msra.mxu0 %v248
      %265 = vmatprep.subr.bf16.mxu0 0
      %266 = vmatpush1.bf16.msra.mxu0 %v247
      %267 = vmatprep.subr.bf16.mxu0 0
      %268 = vmatpush1.bf16.msra.mxu0 %v246
      %269 = vmatprep.subr.bf16.mxu0 0
      %270 = vmatpush1.bf16.msra.mxu0 %v245
      %271 = vmatprep.subr.bf16.mxu0 0
      %272 = vmatpush1.bf16.msra.mxu0 %v244
      %273 = vmatprep.subr.bf16.mxu0 0
      %274 = vmatpush1.bf16.msra.mxu0 %v243
      %275 = vmatprep.subr.bf16.mxu0 0
      %276 = vmatpush2.bf16.msra.mxu0 0
      %277 = vmatprep.subr.bf16.mxu0 0
      %278 = vmatpush2.bf16.msra.mxu0 0
      %279 = vmatprep.subr.bf16.mxu0 0
      %280 = vmatpush2.bf16.msra.mxu0 0
      %281 = vmatprep.subr.bf16.mxu0 0
      %282 = vmatpush2.bf16.msra.mxu0 0
      %283 = vmatprep.subr.bf16.mxu0 0
      %284 = vmatpush2.bf16.msra.mxu0 0
      %285 = vmatprep.subr.bf16.mxu0 0
      %286 = vmatpush2.bf16.msra.mxu0 0
      %287 = vmatprep.subr.bf16.mxu0 0
      %288 = vmatpush2.bf16.msra.mxu0 0
      %289 = vmatprep.subr.bf16.mxu0 0
      %290 = vmatpush2.bf16.msra.mxu0 0
      %291 = vmatprep.mubr.bf16.mxu0 0
      %292 = vmatmul.mubr.bf16.gmra.mxu0 %v203
      %v293 = vpop.f32.mrf.mxu0
      %v294 = vadd.f32 0.0, %v293
      %v295 = vpop.f32.mrf.mxu0
      %v296 = vpop.f32.mrf.mxu0
      %v297 = vadd.f32 0.0, %v296
      %v298 = vpop.f32.mrf.mxu0
      %299 = vmatprep.mubr.bf16.mxu0 0
      %300 = vmatmul.mubr.bf16.gmra.mxu0 %v204
      %v301 = vpop.f32.mrf.mxu0
      %v302 = vadd.f32 0.0, %v301
      %v303 = vpop.f32.mrf.mxu0
      %v304 = vpop.f32.mrf.mxu0
      %v305 = vadd.f32 0.0, %v304
      %v306 = vpop.f32.mrf.mxu0
      %307 = vmatprep.mubr.bf16.mxu0 0
      %308 = vmatmul.mubr.bf16.gmra.mxu0 %v205
      %v309 = vpop.f32.mrf.mxu0
      %v310 = vadd.f32 0.0, %v309
      %v311 = vpop.f32.mrf.mxu0
      %v312 = vpop.f32.mrf.mxu0
      %v313 = vadd.f32 0.0, %v312
      %v314 = vpop.f32.mrf.mxu0
      %315 = vmatprep.mubr.bf16.mxu0 0
      %316 = vmatmul.mubr.bf16.gmra.mxu0 %v206
      %v317 = vpop.f32.mrf.mxu0
      %v318 = vadd.f32 0.0, %v317
      %v319 = vpop.f32.mrf.mxu0
      %v320 = vpop.f32.mrf.mxu0
      %v321 = vadd.f32 0.0, %v320
      %v322 = vpop.f32.mrf.mxu0
      %323 = vdwg.mxu0
      %v324 = vld [vmem:[%s2] sm:$0x1]
      %v325 = vadd.f32 %v294, %v297
      %v326 = vadd.f32 %v325, %v302
      %v327 = vadd.f32 %v326, %v305
      %v328 = vadd.f32 %v327, %v310
      %v329 = vadd.f32 %v328, %v313
      %v330 = vadd.f32 %v329, %v318
      %v331 = vadd.f32 %v330, %v321
      %v332 = vrot.slane %v331, 4
      %v333 = vadd.f32 %v331, %v332
      %v334 = vrot.slane %v333, 2
      %v335 = vadd.f32 %v333, %v334
      %v336 = vrot.slane %v335, 1
      %v337 = vadd.f32 %v335, %v336
      %v338 = vadd.f32 %v324, %v337
      %339 = vst [vmem:[%s2] sm:$0x1] %v338
      %v340 = vld [vmem:[%s3] sm:$0x1]
      %v341 = vmul.f32 %v294, %v294
      %v342 = vmul.f32 %v297, %v297
      %v343 = vmul.f32 %v302, %v302
      %v344 = vmul.f32 %v305, %v305
      %v345 = vmul.f32 %v310, %v310
      %v346 = vmul.f32 %v313, %v313
      %v347 = vmul.f32 %v318, %v318
      %v348 = vmul.f32 %v321, %v321
      %v349 = vadd.f32 %v341, %v342
      %v350 = vadd.f32 %v349, %v343
      %v351 = vadd.f32 %v350, %v344
      %v352 = vadd.f32 %v351, %v345
      %v353 = vadd.f32 %v352, %v346
      %v354 = vadd.f32 %v353, %v347
      %v355 = vadd.f32 %v354, %v348
      %v356 = vrot.slane %v355, 4
      %v357 = vadd.f32 %v355, %v356
      %v358 = vrot.slane %v357, 2
      %v359 = vadd.f32 %v357, %v358
      %v360 = vrot.slane %v359, 1
      %v361 = vadd.f32 %v359, %v360
      %v362 = vadd.f32 %v340, %v361
      %363 = vst [vmem:[%s3] sm:$0x1] %v362
      // Predicated region
      $region33: #{_cbl_forward.2} parent=27 // pred_check
        %p364 = pneg %p75
      $region34: #{_cbl_forward.2} parent=27 // pred_check_branch
        %366 = sbr.rel (%p364) target = $region36
      $region35: #{_cbl_forward.2} parent=27 // pred_region
        _
      $region36: #{_cbl_forward.2} parent=27 // pred_fallthru
        _
      // Predicated region
      $region37: #{_cbl_forward.2} parent=27 // pred_check
        %p367 = pneg %p96
      $region38: #{_cbl_forward.2} parent=27 // pred_check_branch
        %369 = sbr.rel (%p367) target = $region40
      $region39: #{_cbl_forward.2} parent=27 // pred_region
        _
      $region40: #{_cbl_forward.2} parent=27 // pred_fallthru
        _
      // Predicated region
      $region41: #{_cbl_forward.2} parent=27 // pred_check
        %p370 = pneg %p75
      $region42: #{_cbl_forward.2} parent=27 // pred_check_branch
        %372 = sbr.rel (%p370) target = $region44
      $region43: #{_cbl_forward.2} parent=27 // pred_region
        _
      $region44: #{_cbl_forward.2} parent=27 // pred_fallthru
        _
      // Predicated region
      $region45: #{_cbl_forward.2} parent=27 // pred_check
        %p373 = pneg %p96
      $region46: #{_cbl_forward.2} parent=27 // pred_check_branch
        %375 = sbr.rel (%p373) target = $region48
      $region47: #{_cbl_forward.2} parent=27 // pred_region
        _
      $region48: #{_cbl_forward.2} parent=27 // pred_fallthru
        _
    $region28: #{_cbl_forward.2} parent=5 // pred_fallthru
      _
    %p376 = scmp.le.s32.totalorder 2, %s10
    // Predicated region
    $region49: #{_cbl_forward.2} parent=5 // pred_check
      %p377 = pneg %p376
    $region50: #{_cbl_forward.2} parent=5 // pred_check_branch
      %379 = sbr.rel (%p377) target = $region52
    $region51: #{_cbl_forward.2} parent=5 // pred_region
      %s380 = ssub.s32 %s10, 2
    $region52: #{_cbl_forward.2} parent=5 // pred_fallthru
      _
  $region6: #{_cbl_forward.2} parent=0 // loop_footer
    %s14 = sadd.s32 1, %s10
  $region7: #{_cbl_forward.2} parent=0 // loop_footer_branch
    %9 = sbr.rel target = $region3
  $region8: #{_cbl_forward.2} parent=0 // loop_exit
    _

</llo_original>
